<compile_context>
chip_gen: v6e
topology: v6e:2x2x1
jax: 0.10.0
libtpu: 0.0.40
codegen_flags: <defaults>
</compile_context>

<pallas_src>
import math

import jax
import jax.numpy as jnp
from jax import lax
from jax.experimental import pallas as pl
from jax.experimental.pallas import tpu as pltpu


def _round_up(x, m):
    return ((x + m - 1) // m) * m


def _fused_temporal_kernel(col_ref, table_ref, bias_ref, o_ref):
    # col_ref  : (tm, S) int32   streamed one-hot column ids, S = 2 * t_patch
    # table_ref: (Kpad, Nd) f32  folded (conv-weight @ embedding) table, resident
    # bias_ref : (1, Nd)  f32    conv bias, resident
    # o_ref    : (tm, Nd) f32    output rows (true Nd, no lane padding)
    tm = o_ref.shape[0]
    kpad = table_ref.shape[0]
    cols = col_ref[...]                                      # (tm, S) int32
    iota = lax.broadcasted_iota(jnp.int32, (tm, kpad), 1)
    # Multi-hot selection matrix; the S column ranges are disjoint so a plain
    # sum of the 0/1 comparisons is exact.
    mh = jnp.zeros((tm, kpad), jnp.float32)
    for s in range(cols.shape[1]):                           # static, S small
        mh = mh + (iota == cols[:, s:s + 1]).astype(jnp.float32)
    # Exact f32 gather-sum realized on the MXU (mh entries are 0/1).
    acc = jnp.dot(mh, table_ref[...],
                  preferred_element_type=jnp.float32,
                  precision=jax.lax.Precision.HIGHEST)
    o_ref[...] = acc + bias_ref[...]


def _choose_tm(m_rows, kpad, nd, vmem_budget=8 * 1024 * 1024):
    # Per-step footprint (f32 / int32, lane-padded):
    #   2x (tm, 128)   streamed col block (double-buffered)
    #   2x (tm, ~nd)   output block       (double-buffered)
    #   1x (tm, kpad)  multi-hot temporary
    #   1x (kpad, nd)  resident table + bias
    # Budget of 8 MiB keeps us below v5e's 16 MiB default scoped VMEM without
    # any vmem_limit override; v6e/v7x have more headroom than we need.
    nd_lanes = _round_up(nd, 128)
    tm = 1024
    while tm > 16:
        vmem = (2 * tm * 128 * 4 + 2 * tm * nd_lanes * 4
                + tm * kpad * 4 + kpad * nd_lanes * 4 + nd_lanes * 4)
        if vmem <= vmem_budget:
            break
        tm //= 2
    # Megacore (v7x): keep >= 2 grid steps when there is enough work so the
    # "parallel" axis can shard across both TensorCores.
    tm = min(tm, max(8, _round_up(pl.cdiv(m_rows, 2), 8)))
    return max(tm, 8)


def fused_temporal_matmul(col_idx, table, bias):
    """out (M, Nd) = multihot(col_idx) @ table + bias, tiled over M."""
    M, S = col_idx.shape
    Kpad, Nd = table.shape
    tm = _choose_tm(M, Kpad, Nd)
    grid_m = pl.cdiv(M, tm)   # ragged last block handled by Pallas masking

    cost = pl.CostEstimate(
        flops=2 * grid_m * tm * Kpad * Nd,
        transcendentals=0,
        bytes_accessed=4 * (M * S + Kpad * Nd + Nd + M * Nd),
    )

    return pl.pallas_call(
        _fused_temporal_kernel,
        out_shape=jax.ShapeDtypeStruct((M, Nd), jnp.float32),
        grid=(grid_m,),
        in_specs=[
            pl.BlockSpec((tm, S), lambda i: (i, 0)),      # indices: streamed
            pl.BlockSpec((Kpad, Nd), lambda i: (0, 0)),   # table:   resident
            pl.BlockSpec((1, Nd), lambda i: (0, 0)),      # bias:    resident
        ],
        out_specs=pl.BlockSpec((tm, Nd), lambda i: (i, 0)),
        compiler_params=pltpu.CompilerParams(
            dimension_semantics=("parallel",)),
        cost_estimate=cost,
    )(col_idx, table, bias)


def temporal_embedding(x_mark, hour_table, weekday_table, conv_w, conv_b,
                       t_patch_size):
    """TemporalEmbedding.forward: Conv1d(hour_emb + weekday_emb), k=s=p."""
    N, T, _ = x_mark.shape
    d_out, _, p = conv_w.shape
    hs = hour_table.shape[0]
    ws = weekday_table.shape[0]
    Lp = (T - p) // p + 1                                  # conv output length
    M = N * Lp

    # One-time tiny precompute (O(p*(hs+ws)*d^2) flops): fold the conv weight
    # into the embedding tables so the per-timestep work is a pure gather-sum.
    hi = jax.lax.Precision.HIGHEST
    proj_h = jnp.einsum('hi,oij->jho', hour_table, conv_w,
                        precision=hi).reshape(p * hs, d_out)
    proj_w = jnp.einsum('wi,oij->jwo', weekday_table, conv_w,
                        precision=hi).reshape(p * ws, d_out)
    ktot = p * hs + p * ws
    kpad = max(128, _round_up(ktot, 128))                  # lane-dense mh width
    table = jnp.concatenate(
        [proj_h, proj_w, jnp.zeros((kpad - ktot, d_out), jnp.float32)],
        axis=0).astype(jnp.float32)
    bias = conv_b.reshape(1, d_out).astype(jnp.float32)

    # Index prep (O(M * 2p) int ops — the only O(M) host-side work; no pad,
    # no cast, no slice passes over any large activation).
    idx = x_mark[:, :Lp * p, :].astype(jnp.int32).reshape(M, p, x_mark.shape[-1])
    hour_col = idx[:, :, 1] + (jnp.arange(p, dtype=jnp.int32) * hs)[None, :]
    wd_col = idx[:, :, 0] + (p * hs
                             + jnp.arange(p, dtype=jnp.int32) * ws)[None, :]
    col_idx = jnp.concatenate([hour_col, wd_col], axis=-1)          # (M, 2p)

    out = fused_temporal_matmul(col_idx, table, bias)               # (M, d)
    return out.reshape(N, Lp, d_out)


def data_embedding_forward(x, x_mark, hour_table, weekday_table,
                           conv_w, conv_b, t_patch_size):
    """DataEmbedding.forward: returns repeat_interleave(TimeEmb, rep, dim=1)."""
    N, T, C, H, W = x.shape
    p = t_patch_size

    time_emb = temporal_embedding(x_mark, hour_table, weekday_table,
                                  conv_w, conv_b, p)                # (N, T//p, d)

    # TODO(synk): TokenEmbedding's nn.Conv1d is applied to a 5-D tensor in the
    # original forward (invalid for Conv1d) and its values never reach the
    # returned output; only its output length (H*W flattened into the conv
    # length dim, kernel=stride=p) determines the repeat factor.
    token_len = (H * W - p) // p + 1
    rep = token_len // time_emb.shape[1]   # floor-div == repeat_interleave arg
    assert rep >= 1, ("repeat factor truncated to zero", token_len,
                      time_emb.shape)
    # TODO(synk): the replication is left to XLA; fusing it into the kernel's
    # output stream would save only ~2/rep of the total writeback.
    return jnp.repeat(time_emb, rep, axis=1)


if __name__ == "__main__":
    N, T, C, H, W = 2, 8, 4, 16, 16
    d_model = 32
    t_patch_size = 2
    hour_size, weekday_size = 48, 7

    key = jax.random.PRNGKey(0)
    kx, kh, kd, kht, kwt, kcw, kcb = jax.random.split(key, 7)

    x = jax.random.normal(kx, (N, T, C, H, W), dtype=jnp.float32)
    hours = jax.random.randint(kh, (N, T), 0, hour_size)
    wdays = jax.random.randint(kd, (N, T), 0, weekday_size)
    x_mark = jnp.stack([wdays, hours], axis=-1).astype(jnp.int32)   # (N, T, 2)

    # nn.Embedding default init: N(0, 1)
    hour_table = jax.random.normal(kht, (hour_size, d_model), dtype=jnp.float32)
    weekday_table = jax.random.normal(kwt, (weekday_size, d_model),
                                      dtype=jnp.float32)

    # nn.Conv1d default init: U(-1/sqrt(fan_in), 1/sqrt(fan_in)),
    # fan_in = in_channels * kernel_size = d_model * p
    fan_in = d_model * t_patch_size
    bound = 1.0 / math.sqrt(fan_in)
    conv_w = jax.random.uniform(kcw, (d_model, d_model, t_patch_size),
                                dtype=jnp.float32, minval=-bound, maxval=bound)
    conv_b = jax.random.uniform(kcb, (d_model,), dtype=jnp.float32,
                                minval=-bound, maxval=bound)

    out = data_embedding_forward(x, x_mark, hour_table, weekday_table,
                                 conv_w, conv_b, t_patch_size)
    out = jax.block_until_ready(out)

    # ---- pure-JAX f32 reference (PyTorch forward semantics) ----
    p = t_patch_size
    Lp = (T - p) // p + 1
    e = hour_table[x_mark[:, :, 1]] + weekday_table[x_mark[:, :, 0]]   # (N,T,d)
    e_pat = e[:, :Lp * p, :].reshape(N, Lp, p, d_model)                # (N,Lp,p,d)
    time_ref = jnp.einsum('nlji,oij->nlo', e_pat, conv_w,
                          precision=jax.lax.Precision.HIGHEST) + conv_b
    token_len = (H * W - p) // p + 1
    rep = token_len // Lp
    ref = jnp.repeat(time_ref, rep, axis=1)

    assert out.shape == ref.shape == (N, Lp * rep, d_model), (out.shape, ref.shape)
    assert jnp.allclose(out, ref, atol=1e-2, rtol=1e-2), \
        float(jnp.max(jnp.abs(out - ref)))

    print("KERNEL_OK")
</pallas_src>

<mosaic_0001>
module attributes {stable_mosaic.version = 11 : i64} {
  func.func @_fused_temporal_kernel(%arg0: i32, %arg1: memref<8x4xi32, #tpu.memory_space<vmem>>, %arg2: memref<128x32xf32, #tpu.memory_space<vmem>>, %arg3: memref<1x32xf32, #tpu.memory_space<vmem>>, %arg4: memref<8x32xf32, #tpu.memory_space<vmem>>) attributes {dimension_semantics = [#tpu.dimension_semantics<parallel>], iteration_bounds = array<i64: 1>, scalar_prefetch = 0 : i64, scratch_operands = 0 : i64, tpu.core_type = #tpu.core_type<tc>, window_params = [{transform_indices = @transform_0, window_bounds = array<i64: 8, 4>}, {pipeline_mode = #tpu.pipeline_mode<synchronous>, transform_indices = @transform_1, window_bounds = array<i64: 128, 32>}, {pipeline_mode = #tpu.pipeline_mode<synchronous>, transform_indices = @transform_2, window_bounds = array<i64: 1, 32>}, {transform_indices = @transform_3, window_bounds = array<i64: 8, 32>}]} {
    %c0 = arith.constant 0 : index
    %c0_0 = arith.constant 0 : index
    %0 = vector.load %arg1[%c0, %c0_0] : memref<8x4xi32, #tpu.memory_space<vmem>>, vector<8x4xi32>
    %1 = tpu.iota {dimensions = array<i32: 1>} : vector<8x128xi32>
    %cst = arith.constant 0.000000e+00 : f32
    %2 = vector.broadcast %cst : f32 to vector<8x128xf32>
    %3 = vector.extract_strided_slice %0 {offsets = [0, 0], sizes = [8, 1], strides = [1, 1]} : vector<8x4xi32> to vector<8x1xi32>
    %4 = vector.broadcast %3 : vector<8x1xi32> to vector<8x128xi32>
    %5 = arith.cmpi eq, %1, %4 : vector<8x128xi32>
    %6 = arith.extui %5 : vector<8x128xi1> to vector<8x128xi32>
    %7 = arith.sitofp %6 : vector<8x128xi32> to vector<8x128xf32>
    %8 = arith.addf %2, %7 : vector<8x128xf32>
    %9 = vector.extract_strided_slice %0 {offsets = [0, 1], sizes = [8, 1], strides = [1, 1]} : vector<8x4xi32> to vector<8x1xi32>
    %10 = vector.broadcast %9 : vector<8x1xi32> to vector<8x128xi32>
    %11 = arith.cmpi eq, %1, %10 : vector<8x128xi32>
    %12 = arith.extui %11 : vector<8x128xi1> to vector<8x128xi32>
    %13 = arith.sitofp %12 : vector<8x128xi32> to vector<8x128xf32>
    %14 = arith.addf %8, %13 : vector<8x128xf32>
    %15 = vector.extract_strided_slice %0 {offsets = [0, 2], sizes = [8, 1], strides = [1, 1]} : vector<8x4xi32> to vector<8x1xi32>
    %16 = vector.broadcast %15 : vector<8x1xi32> to vector<8x128xi32>
    %17 = arith.cmpi eq, %1, %16 : vector<8x128xi32>
    %18 = arith.extui %17 : vector<8x128xi1> to vector<8x128xi32>
    %19 = arith.sitofp %18 : vector<8x128xi32> to vector<8x128xf32>
    %20 = arith.addf %14, %19 : vector<8x128xf32>
    %21 = vector.extract_strided_slice %0 {offsets = [0, 3], sizes = [8, 1], strides = [1, 1]} : vector<8x4xi32> to vector<8x1xi32>
    %22 = vector.broadcast %21 : vector<8x1xi32> to vector<8x128xi32>
    %23 = arith.cmpi eq, %1, %22 : vector<8x128xi32>
    %24 = arith.extui %23 : vector<8x128xi1> to vector<8x128xi32>
    %25 = arith.sitofp %24 : vector<8x128xi32> to vector<8x128xf32>
    %26 = arith.addf %20, %25 : vector<8x128xf32>
    %c0_1 = arith.constant 0 : index
    %c0_2 = arith.constant 0 : index
    %27 = vector.load %arg2[%c0_1, %c0_2] : memref<128x32xf32, #tpu.memory_space<vmem>>, vector<128x32xf32>
    %cst_3 = arith.constant dense<0.000000e+00> : vector<8x32xf32>
    %28 = tpu.matmul %26, %27, %cst_3 {dimension_numbers = #tpu.dot_dimension_numbers<[1], [0], [0], [1], [0, 0, 1, 1], [], []>, precision = #tpu.contract_precision<fp32>} : vector<8x128xf32>, vector<128x32xf32>, vector<8x32xf32> -> vector<8x32xf32>
    %c0_4 = arith.constant 0 : index
    %c0_5 = arith.constant 0 : index
    %29 = vector.load %arg3[%c0_4, %c0_5] : memref<1x32xf32, #tpu.memory_space<vmem>>, vector<1x32xf32>
    %30 = vector.broadcast %29 : vector<1x32xf32> to vector<8x32xf32>
    %31 = arith.addf %28, %30 : vector<8x32xf32>
    %c0_6 = arith.constant 0 : index
    %c0_7 = arith.constant 0 : index
    %32 = vector.load %arg4[%c0_6, %c0_7] : memref<8x32xf32, #tpu.memory_space<vmem>>, vector<8x32xf32>
    tpu.vector_store %arg4[%c0_6, %c0_7], %31 {strides = array<i32>} : memref<8x32xf32, #tpu.memory_space<vmem>>, vector<8x32xf32>,
    return
  }
  func.func @transform_0(%arg0: i32) -> (i32, i32) {
    %c0_i32 = arith.constant 0 : i32
    %c0_i32_0 = arith.constant 0 : i32
    return %arg0, %c0_i32 : i32, i32
  }
  func.func @transform_1(%arg0: i32) -> (i32, i32) {
    %c0_i32 = arith.constant 0 : i32
    %c0_i32_0 = arith.constant 0 : i32
    %c0_i32_1 = arith.constant 0 : i32
    return %c0_i32, %c0_i32_0 : i32, i32
  }
  func.func @transform_2(%arg0: i32) -> (i32, i32) {
    %c0_i32 = arith.constant 0 : i32
    %c0_i32_0 = arith.constant 0 : i32
    %c0_i32_1 = arith.constant 0 : i32
    return %c0_i32, %c0_i32_0 : i32, i32
  }
  func.func @transform_3(%arg0: i32) -> (i32, i32) {
    %c0_i32 = arith.constant 0 : i32
    %c0_i32_0 = arith.constant 0 : i32
    return %arg0, %c0_i32 : i32, i32
  }
}

</mosaic_0001>

<llo_original>
// kernel: tpu_custom_call.1
$region0: #{tpu_custom_call.1}
  #allocation0 [shape = 'u32[]', space=smem, size = 0x4, offset = 0x4, fixed_abs, tag = 'smem constant byte address 0x4 - core index']
  #allocation1 [shape = 'u32[144,128]{1,0:T(1,128)}', space=vmem, size = 0x12000, scoped, tag = 'internal scratch']
  %s0 = inlined_call_operand.vmem [shape: s32[8,4], index: 0, kind: input, shape index: {}]
  %s1 = inlined_call_operand.vmem [shape: f32[128,32], index: 1, kind: input, shape index: {}]
  %s2 = inlined_call_operand.vmem [shape: f32[1,32], index: 2, kind: input, shape index: {}]
  %s3 = inlined_call_operand.hbm [shape: f32[8,32], index: 3, kind: output, shape index: {}]
  %s4 = sld [smem:[#allocation0]]
  $region22: #{tpu_custom_call.1} parent=0
    _
  %s6 = ssub.s32 1, %s4
  %s7 = scalar_select 0, %s6, %s4
  $region1: #{tpu_custom_call.1} parent=0
    #allocation2 [shape = 'u8[4096]{0}', space=vmem, size = 0x1000, scoped, tag = 'output window, operand 0, single buffered']
    #allocation3 [shape = 's32[1]{0}', space=sflag, size = 0x4, scoped, tag = 'scoped memory for tpu_custom_call.1']
    %8 = vsyncpa [#allocation3], 0
    // Predicated region
    $region2: #{tpu_custom_call.1} parent=1 // pred_check
      _
    $region3: #{tpu_custom_call.1} parent=1 // pred_check_branch
      %10 = sbr.rel (0) target = $region5
    $region4: #{tpu_custom_call.1} parent=1 // pred_region
      _
    $region5: #{tpu_custom_call.1} parent=1 // pred_fallthru
      _
    // Predicated region
    $region6: #{tpu_custom_call.1} parent=1 // pred_check
      _
    $region7: #{tpu_custom_call.1} parent=1 // pred_check_branch
      %12 = sbr.rel (0) target = $region9
    $region8: #{tpu_custom_call.1} parent=1 // pred_region
      _
    $region9: #{tpu_custom_call.1} parent=1 // pred_fallthru
      _
    // Predicated region
    $region10: #{tpu_custom_call.1} parent=1 // pred_check
      _
    $region11: #{tpu_custom_call.1} parent=1 // pred_check_branch
      %14 = sbr.rel (0) target = $region13
    $region12: #{tpu_custom_call.1} parent=1 // pred_region
      _
    $region13: #{tpu_custom_call.1} parent=1 // pred_fallthru
      _
    %v15 = vld [vmem:[%s0] sm:$0xff]
    %v16 = vlaneseq
    %v17 = vand.u32 %v16, 127
    %18 = vset.pattern.permute.xlu0 0
    %19 = vperm.xlu0 %18, %v15
    %v20 = vpop.permute.xlu0 %19
    %vm21 = vcmp.eq.s32.totalorder %v17, %v20
    %v22 = vsel %vm21, 1, 0
    %v23 = vcvt.s32.f32 %v22
    %v24 = vadd.f32 %v23, 0.0
    %25 = vset.pattern.permute.xlu0 1
    %26 = vperm.xlu0 %25, %v15
    %v27 = vpop.permute.xlu0 %26
    %vm28 = vcmp.eq.s32.totalorder %v17, %v27
    %v29 = vsel %vm28, 1, 0
    %v30 = vcvt.s32.f32 %v29
    %v31 = vadd.f32 %v24, %v30
    %32 = vset.pattern.permute.xlu0 2
    %33 = vperm.xlu0 %32, %v15
    %v34 = vpop.permute.xlu0 %33
    %vm35 = vcmp.eq.s32.totalorder %v17, %v34
    %v36 = vsel %vm35, 1, 0
    %v37 = vcvt.s32.f32 %v36
    %v38 = vadd.f32 %v31, %v37
    %39 = vset.pattern.permute.xlu0 3
    %40 = vperm.xlu0 %39, %v15
    %v41 = vpop.permute.xlu0 %40
    %vm42 = vcmp.eq.s32.totalorder %v17, %v41
    %v43 = vsel %vm42, 1, 0
    %v44 = vcvt.s32.f32 %v43
    %v45 = vadd.f32 %v38, %v44
    %v46 = vld [vmem:[%s1] sm:$0xff]
    %v47 = vld [vmem:[%s1 + $0x8] sm:$0xff]
    %v48 = vld [vmem:[%s1 + $0x10] sm:$0xff]
    %v49 = vld [vmem:[%s1 + $0x18] sm:$0xff]
    %v50 = vld [vmem:[%s1 + $0x20] sm:$0xff]
    %v51 = vld [vmem:[%s1 + $0x28] sm:$0xff]
    %v52 = vld [vmem:[%s1 + $0x30] sm:$0xff]
    %v53 = vld [vmem:[%s1 + $0x38] sm:$0xff]
    %v54 = vld [vmem:[%s1 + $0x40] sm:$0xff]
    %v55 = vld [vmem:[%s1 + $0x48] sm:$0xff]
    %v56 = vld [vmem:[%s1 + $0x50] sm:$0xff]
    %v57 = vld [vmem:[%s1 + $0x58] sm:$0xff]
    %v58 = vld [vmem:[%s1 + $0x60] sm:$0xff]
    %v59 = vld [vmem:[%s1 + $0x68] sm:$0xff]
    %v60 = vld [vmem:[%s1 + $0x70] sm:$0xff]
    %v61 = vld [vmem:[%s1 + $0x78] sm:$0xff]
    %v62 = vld [vmem:[%s2] sm:$0x1]
    %v64 = vlaneseq
    %v65 = vshrl.u32 %v64, 7
    %v66 = vsub.s32 0, %v65
    %v67 = vrot.slane %v62, %v66
    %69 = vmatprep.subr.mxu0 0.0
    %v70 = vand.u32 %v61, 4294901760
    %71 = vmatpush1.msra.mxu0 %v70
    %72 = vmatprep.subr.mxu0 0.0
    %v73 = vand.u32 %v60, 4294901760
    %74 = vmatpush1.msra.mxu0 %v73
    %75 = vmatprep.subr.mxu0 0.0
    %v76 = vand.u32 %v59, 4294901760
    %77 = vmatpush1.msra.mxu0 %v76
    %78 = vmatprep.subr.mxu0 0.0
    %v79 = vand.u32 %v58, 4294901760
    %80 = vmatpush1.msra.mxu0 %v79
    %81 = vmatprep.subr.mxu0 0.0
    %v82 = vand.u32 %v57, 4294901760
    %83 = vmatpush1.msra.mxu0 %v82
    %84 = vmatprep.subr.mxu0 0.0
    %v85 = vand.u32 %v56, 4294901760
    %86 = vmatpush1.msra.mxu0 %v85
    %87 = vmatprep.subr.mxu0 0.0
    %v88 = vand.u32 %v55, 4294901760
    %89 = vmatpush1.msra.mxu0 %v88
    %90 = vmatprep.subr.mxu0 0.0
    %v91 = vand.u32 %v54, 4294901760
    %92 = vmatpush1.msra.mxu0 %v91
    %93 = vmatprep.subr.mxu0 0.0
    %v94 = vand.u32 %v53, 4294901760
    %95 = vmatpush1.msra.mxu0 %v94
    %96 = vmatprep.subr.mxu0 0.0
    %v97 = vand.u32 %v52, 4294901760
    %98 = vmatpush1.msra.mxu0 %v97
    %99 = vmatprep.subr.mxu0 0.0
    %v100 = vand.u32 %v51, 4294901760
    %101 = vmatpush1.msra.mxu0 %v100
    %102 = vmatprep.subr.mxu0 0.0
    %v103 = vand.u32 %v50, 4294901760
    %104 = vmatpush1.msra.mxu0 %v103
    %105 = vmatprep.subr.mxu0 0.0
    %v106 = vand.u32 %v49, 4294901760
    %107 = vmatpush1.msra.mxu0 %v106
    %108 = vmatprep.subr.mxu0 0.0
    %v109 = vand.u32 %v48, 4294901760
    %110 = vmatpush1.msra.mxu0 %v109
    %111 = vmatprep.subr.mxu0 0.0
    %v112 = vand.u32 %v47, 4294901760
    %113 = vmatpush1.msra.mxu0 %v112
    %114 = vmatprep.subr.mxu0 0.0
    %v115 = vand.u32 %v46, 4294901760
    %116 = vmatpush1.msra.mxu0 %v115
    %117 = vmatprep.subr.mxu0 0.0
    %118 = vmatpush2.msra.mxu0 0.0
    %119 = vmatprep.subr.mxu0 0.0
    %120 = vmatpush2.msra.mxu0 0.0
    %121 = vmatprep.subr.mxu0 0.0
    %122 = vmatpush2.msra.mxu0 0.0
    %123 = vmatprep.subr.mxu0 0.0
    %124 = vmatpush2.msra.mxu0 0.0
    %125 = vmatprep.subr.mxu0 0.0
    %126 = vmatpush2.msra.mxu0 0.0
    %127 = vmatprep.subr.mxu0 0.0
    %128 = vmatpush2.msra.mxu0 0.0
    %129 = vmatprep.subr.mxu0 0.0
    %130 = vmatpush2.msra.mxu0 0.0
    %131 = vmatprep.subr.mxu0 0.0
    %132 = vmatpush2.msra.mxu0 0.0
    %133 = vmatprep.subr.mxu0 0.0
    %134 = vmatpush2.msra.mxu0 0.0
    %135 = vmatprep.subr.mxu0 0.0
    %136 = vmatpush2.msra.mxu0 0.0
    %137 = vmatprep.subr.mxu0 0.0
    %138 = vmatpush2.msra.mxu0 0.0
    %139 = vmatprep.subr.mxu0 0.0
    %140 = vmatpush2.msra.mxu0 0.0
    %141 = vmatprep.subr.mxu0 0.0
    %142 = vmatpush2.msra.mxu0 0.0
    %143 = vmatprep.subr.mxu0 0.0
    %144 = vmatpush2.msra.mxu0 0.0
    %145 = vmatprep.subr.mxu0 0.0
    %146 = vmatpush2.msra.mxu0 0.0
    %147 = vmatprep.subr.mxu0 0.0
    %148 = vmatpush2.msra.mxu0 0.0
    %149 = vmatprep.mubr.f32.mxu0 0.0
    %v150 = vand.u32 %v45, 4294901760
    %v151 = vsub.f32 %v45, %v150
    %v152 = vand.u32 %v151, 4294901760
    %v153 = vsub.f32 %v151, %v152
    %v154 = vand.u32 %v153, 4294901760
    %155 = vmatmul.mubr.f32.gmra.mxu0 %v154
    %v156 = vpop.f32.mrf.mxu0
    %v157 = vadd.f32 %v67, %v156
    %v158 = vpop.f32.mrf.mxu0
    %159 = vdwg.mxu0
    %160 = vmatprep.subr.mxu0 0.0
    %v161 = vand.u32 %v61, 4294901760
    %v162 = vsub.f32 %v61, %v161
    %v163 = vand.u32 %v162, 4294901760
    %v164 = vsub.f32 %v162, %v163
    %v165 = vand.u32 %v164, 4294901760
    %166 = vmatpush1.msra.mxu0 %v165
    %167 = vmatprep.subr.mxu0 0.0
    %v168 = vand.u32 %v60, 4294901760
    %v169 = vsub.f32 %v60, %v168
    %v170 = vand.u32 %v169, 4294901760
    %v171 = vsub.f32 %v169, %v170
    %v172 = vand.u32 %v171, 4294901760
    %173 = vmatpush1.msra.mxu0 %v172
    %174 = vmatprep.subr.mxu0 0.0
    %v175 = vand.u32 %v59, 4294901760
    %v176 = vsub.f32 %v59, %v175
    %v177 = vand.u32 %v176, 4294901760
    %v178 = vsub.f32 %v176, %v177
    %v179 = vand.u32 %v178, 4294901760
    %180 = vmatpush1.msra.mxu0 %v179
    %181 = vmatprep.subr.mxu0 0.0
    %v182 = vand.u32 %v58, 4294901760
    %v183 = vsub.f32 %v58, %v182
    %v184 = vand.u32 %v183, 4294901760
    %v185 = vsub.f32 %v183, %v184
    %v186 = vand.u32 %v185, 4294901760
    %187 = vmatpush1.msra.mxu0 %v186
    %188 = vmatprep.subr.mxu0 0.0
    %v189 = vand.u32 %v57, 4294901760
    %v190 = vsub.f32 %v57, %v189
    %v191 = vand.u32 %v190, 4294901760
    %v192 = vsub.f32 %v190, %v191
    %v193 = vand.u32 %v192, 4294901760
    %194 = vmatpush1.msra.mxu0 %v193
    %195 = vmatprep.subr.mxu0 0.0
    %v196 = vand.u32 %v56, 4294901760
    %v197 = vsub.f32 %v56, %v196
    %v198 = vand.u32 %v197, 4294901760
    %v199 = vsub.f32 %v197, %v198
    %v200 = vand.u32 %v199, 4294901760
    %201 = vmatpush1.msra.mxu0 %v200
    %202 = vmatprep.subr.mxu0 0.0
    %v203 = vand.u32 %v55, 4294901760
    %v204 = vsub.f32 %v55, %v203
    %v205 = vand.u32 %v204, 4294901760
    %v206 = vsub.f32 %v204, %v205
    %v207 = vand.u32 %v206, 4294901760
    %208 = vmatpush1.msra.mxu0 %v207
    %209 = vmatprep.subr.mxu0 0.0
    %v210 = vand.u32 %v54, 4294901760
    %v211 = vsub.f32 %v54, %v210
    %v212 = vand.u32 %v211, 4294901760
    %v213 = vsub.f32 %v211, %v212
    %v214 = vand.u32 %v213, 4294901760
    %215 = vmatpush1.msra.mxu0 %v214
    %216 = vmatprep.subr.mxu0 0.0
    %v217 = vand.u32 %v53, 4294901760
    %v218 = vsub.f32 %v53, %v217
    %v219 = vand.u32 %v218, 4294901760
    %v220 = vsub.f32 %v218, %v219
    %v221 = vand.u32 %v220, 4294901760
    %222 = vmatpush1.msra.mxu0 %v221
    %223 = vmatprep.subr.mxu0 0.0
    %v224 = vand.u32 %v52, 4294901760
    %v225 = vsub.f32 %v52, %v224
    %v226 = vand.u32 %v225, 4294901760
    %v227 = vsub.f32 %v225, %v226
    %v228 = vand.u32 %v227, 4294901760
    %229 = vmatpush1.msra.mxu0 %v228
    %230 = vmatprep.subr.mxu0 0.0
    %v231 = vand.u32 %v51, 4294901760
    %v232 = vsub.f32 %v51, %v231
    %v233 = vand.u32 %v232, 4294901760
    %v234 = vsub.f32 %v232, %v233
    %v235 = vand.u32 %v234, 4294901760
    %236 = vmatpush1.msra.mxu0 %v235
    %237 = vmatprep.subr.mxu0 0.0
    %v238 = vand.u32 %v50, 4294901760
    %v239 = vsub.f32 %v50, %v238
    %v240 = vand.u32 %v239, 4294901760
    %v241 = vsub.f32 %v239, %v240
    %v242 = vand.u32 %v241, 4294901760
    %243 = vmatpush1.msra.mxu0 %v242
    %244 = vmatprep.subr.mxu0 0.0
    %v245 = vand.u32 %v49, 4294901760
    %v246 = vsub.f32 %v49, %v245
    %v247 = vand.u32 %v246, 4294901760
    %v248 = vsub.f32 %v246, %v247
    %v249 = vand.u32 %v248, 4294901760
    %250 = vmatpush1.msra.mxu0 %v249
    %251 = vmatprep.subr.mxu0 0.0
    %v252 = vand.u32 %v48, 4294901760
    %v253 = vsub.f32 %v48, %v252
    %v254 = vand.u32 %v253, 4294901760
    %v255 = vsub.f32 %v253, %v254
    %v256 = vand.u32 %v255, 4294901760
    %257 = vmatpush1.msra.mxu0 %v256
    %258 = vmatprep.subr.mxu0 0.0
    %v259 = vand.u32 %v47, 4294901760
    %v260 = vsub.f32 %v47, %v259
    %v261 = vand.u32 %v260, 4294901760
    %v262 = vsub.f32 %v260, %v261
    %v263 = vand.u32 %v262, 4294901760
    %264 = vmatpush1.msra.mxu0 %v263
    %265 = vmatprep.subr.mxu0 0.0
    %v266 = vand.u32 %v46, 4294901760
    %v267 = vsub.f32 %v46, %v266
    %v268 = vand.u32 %v267, 4294901760
    %v269 = vsub.f32 %v267, %v268
    %v270 = vand.u32 %v269, 4294901760
    %271 = vmatpush1.msra.mxu0 %v270
    %272 = vmatprep.subr.mxu0 0.0
    %273 = vmatpush2.msra.mxu0 0.0
    %274 = vmatprep.subr.mxu0 0.0
    %275 = vmatpush2.msra.mxu0 0.0
    %276 = vmatprep.subr.mxu0 0.0
    %277 = vmatpush2.msra.mxu0 0.0
    %278 = vmatprep.subr.mxu0 0.0
    %279 = vmatpush2.msra.mxu0 0.0
    %280 = vmatprep.subr.mxu0 0.0
    %281 = vmatpush2.msra.mxu0 0.0
    %282 = vmatprep.subr.mxu0 0.0
    %283 = vmatpush2.msra.mxu0 0.0
    %284 = vmatprep.subr.mxu0 0.0
    %285 = vmatpush2.msra.mxu0 0.0
    %286 = vmatprep.subr.mxu0 0.0
    %287 = vmatpush2.msra.mxu0 0.0
    %288 = vmatprep.subr.mxu0 0.0
    %289 = vmatpush2.msra.mxu0 0.0
    %290 = vmatprep.subr.mxu0 0.0
    %291 = vmatpush2.msra.mxu0 0.0
    %292 = vmatprep.subr.mxu0 0.0
    %293 = vmatpush2.msra.mxu0 0.0
    %294 = vmatprep.subr.mxu0 0.0
    %295 = vmatpush2.msra.mxu0 0.0
    %296 = vmatprep.subr.mxu0 0.0
    %297 = vmatpush2.msra.mxu0 0.0
    %298 = vmatprep.subr.mxu0 0.0
    %299 = vmatpush2.msra.mxu0 0.0
    %300 = vmatprep.subr.mxu0 0.0
    %301 = vmatpush2.msra.mxu0 0.0
    %302 = vmatprep.subr.mxu0 0.0
    %303 = vmatpush2.msra.mxu0 0.0
    %304 = vmatprep.mubr.f32.mxu0 0.0
    %v305 = vand.u32 %v45, 4294901760
    %306 = vmatmul.mubr.f32.gmra.mxu0 %v305
    %v307 = vpop.f32.mrf.mxu0
    %v308 = vadd.f32 %v157, %v307
    %v309 = vpop.f32.mrf.mxu0
    %310 = vdwg.mxu0
    %311 = vmatprep.subr.mxu0 0.0
    %v312 = vand.u32 %v61, 4294901760
    %v313 = vsub.f32 %v61, %v312
    %314 = vmatpush1.msra.mxu0 %v313
    %315 = vmatprep.subr.mxu0 0.0
    %v316 = vand.u32 %v60, 4294901760
    %v317 = vsub.f32 %v60, %v316
    %318 = vmatpush1.msra.mxu0 %v317
    %319 = vmatprep.subr.mxu0 0.0
    %v320 = vand.u32 %v59, 4294901760
    %v321 = vsub.f32 %v59, %v320
    %322 = vmatpush1.msra.mxu0 %v321
    %323 = vmatprep.subr.mxu0 0.0
    %v324 = vand.u32 %v58, 4294901760
    %v325 = vsub.f32 %v58, %v324
    %326 = vmatpush1.msra.mxu0 %v325
    %327 = vmatprep.subr.mxu0 0.0
    %v328 = vand.u32 %v57, 4294901760
    %v329 = vsub.f32 %v57, %v328
    %330 = vmatpush1.msra.mxu0 %v329
    %331 = vmatprep.subr.mxu0 0.0
    %v332 = vand.u32 %v56, 4294901760
    %v333 = vsub.f32 %v56, %v332
    %334 = vmatpush1.msra.mxu0 %v333
    %335 = vmatprep.subr.mxu0 0.0
    %v336 = vand.u32 %v55, 4294901760
    %v337 = vsub.f32 %v55, %v336
    %338 = vmatpush1.msra.mxu0 %v337
    %339 = vmatprep.subr.mxu0 0.0
    %v340 = vand.u32 %v54, 4294901760
    %v341 = vsub.f32 %v54, %v340
    %342 = vmatpush1.msra.mxu0 %v341
    %343 = vmatprep.subr.mxu0 0.0
    %v344 = vand.u32 %v53, 4294901760
    %v345 = vsub.f32 %v53, %v344
    %346 = vmatpush1.msra.mxu0 %v345
    %347 = vmatprep.subr.mxu0 0.0
    %v348 = vand.u32 %v52, 4294901760
    %v349 = vsub.f32 %v52, %v348
    %350 = vmatpush1.msra.mxu0 %v349
    %351 = vmatprep.subr.mxu0 0.0
    %v352 = vand.u32 %v51, 4294901760
    %v353 = vsub.f32 %v51, %v352
    %354 = vmatpush1.msra.mxu0 %v353
    %355 = vmatprep.subr.mxu0 0.0
    %v356 = vand.u32 %v50, 4294901760
    %v357 = vsub.f32 %v50, %v356
    %358 = vmatpush1.msra.mxu0 %v357
    %359 = vmatprep.subr.mxu0 0.0
    %v360 = vand.u32 %v49, 4294901760
    %v361 = vsub.f32 %v49, %v360
    %362 = vmatpush1.msra.mxu0 %v361
    %363 = vmatprep.subr.mxu0 0.0
    %v364 = vand.u32 %v48, 4294901760
    %v365 = vsub.f32 %v48, %v364
    %366 = vmatpush1.msra.mxu0 %v365
    %367 = vmatprep.subr.mxu0 0.0
    %v368 = vand.u32 %v47, 4294901760
    %v369 = vsub.f32 %v47, %v368
    %370 = vmatpush1.msra.mxu0 %v369
    %371 = vmatprep.subr.mxu0 0.0
    %v372 = vand.u32 %v46, 4294901760
    %v373 = vsub.f32 %v46, %v372
    %374 = vmatpush1.msra.mxu0 %v373
    %375 = vmatprep.subr.mxu0 0.0
    %376 = vmatpush2.msra.mxu0 0.0
    %377 = vmatprep.subr.mxu0 0.0
    %378 = vmatpush2.msra.mxu0 0.0
    %379 = vmatprep.subr.mxu0 0.0
    %380 = vmatpush2.msra.mxu0 0.0
    %381 = vmatprep.subr.mxu0 0.0
    %382 = vmatpush2.msra.mxu0 0.0
    %383 = vmatprep.subr.mxu0 0.0
    %384 = vmatpush2.msra.mxu0 0.0
    %385 = vmatprep.subr.mxu0 0.0
    %386 = vmatpush2.msra.mxu0 0.0
    %387 = vmatprep.subr.mxu0 0.0
    %388 = vmatpush2.msra.mxu0 0.0
    %389 = vmatprep.subr.mxu0 0.0
    %390 = vmatpush2.msra.mxu0 0.0
    %391 = vmatprep.subr.mxu0 0.0
    %392 = vmatpush2.msra.mxu0 0.0
    %393 = vmatprep.subr.mxu0 0.0
    %394 = vmatpush2.msra.mxu0 0.0
    %395 = vmatprep.subr.mxu0 0.0
    %396 = vmatpush2.msra.mxu0 0.0
    %397 = vmatprep.subr.mxu0 0.0
    %398 = vmatpush2.msra.mxu0 0.0
    %399 = vmatprep.subr.mxu0 0.0
    %400 = vmatpush2.msra.mxu0 0.0
    %401 = vmatprep.subr.mxu0 0.0
    %402 = vmatpush2.msra.mxu0 0.0
    %403 = vmatprep.subr.mxu0 0.0
    %404 = vmatpush2.msra.mxu0 0.0
    %405 = vmatprep.subr.mxu0 0.0
    %406 = vmatpush2.msra.mxu0 0.0
    %407 = vmatprep.mubr.f32.mxu0 0.0
    %v408 = vand.u32 %v45, 4294901760
    %v409 = vsub.f32 %v45, %v408
    %410 = vmatmul.mubr.f32.gmra.mxu0 %v409
    %v411 = vpop.f32.mrf.mxu0
    %v412 = vadd.f32 %v308, %v411
    %v413 = vpop.f32.mrf.mxu0
    %414 = vdwg.mxu0
    %415 = vmatprep.subr.mxu0 0.0
    %v416 = vand.u32 %v61, 4294901760
    %417 = vmatpush1.msra.mxu0 %v416
    %418 = vmatprep.subr.mxu0 0.0
    %v419 = vand.u32 %v60, 4294901760
    %420 = vmatpush1.msra.mxu0 %v419
    %421 = vmatprep.subr.mxu0 0.0
    %v422 = vand.u32 %v59, 4294901760
    %423 = vmatpush1.msra.mxu0 %v422
    %424 = vmatprep.subr.mxu0 0.0
    %v425 = vand.u32 %v58, 4294901760
    %426 = vmatpush1.msra.mxu0 %v425
    %427 = vmatprep.subr.mxu0 0.0
    %v428 = vand.u32 %v57, 4294901760
    %429 = vmatpush1.msra.mxu0 %v428
    %430 = vmatprep.subr.mxu0 0.0
    %v431 = vand.u32 %v56, 4294901760
    %432 = vmatpush1.msra.mxu0 %v431
    %433 = vmatprep.subr.mxu0 0.0
    %v434 = vand.u32 %v55, 4294901760
    %435 = vmatpush1.msra.mxu0 %v434
    %436 = vmatprep.subr.mxu0 0.0
    %v437 = vand.u32 %v54, 4294901760
    %438 = vmatpush1.msra.mxu0 %v437
    %439 = vmatprep.subr.mxu0 0.0
    %v440 = vand.u32 %v53, 4294901760
    %441 = vmatpush1.msra.mxu0 %v440
    %442 = vmatprep.subr.mxu0 0.0
    %v443 = vand.u32 %v52, 4294901760
    %444 = vmatpush1.msra.mxu0 %v443
    %445 = vmatprep.subr.mxu0 0.0
    %v446 = vand.u32 %v51, 4294901760
    %447 = vmatpush1.msra.mxu0 %v446
    %448 = vmatprep.subr.mxu0 0.0
    %v449 = vand.u32 %v50, 4294901760
    %450 = vmatpush1.msra.mxu0 %v449
    %451 = vmatprep.subr.mxu0 0.0
    %v452 = vand.u32 %v49, 4294901760
    %453 = vmatpush1.msra.mxu0 %v452
    %454 = vmatprep.subr.mxu0 0.0
    %v455 = vand.u32 %v48, 4294901760
    %456 = vmatpush1.msra.mxu0 %v455
    %457 = vmatprep.subr.mxu0 0.0
    %v458 = vand.u32 %v47, 4294901760
    %459 = vmatpush1.msra.mxu0 %v458
    %460 = vmatprep.subr.mxu0 0.0
    %v461 = vand.u32 %v46, 4294901760
    %462 = vmatpush1.msra.mxu0 %v461
    %463 = vmatprep.subr.mxu0 0.0
    %464 = vmatpush2.msra.mxu0 0.0
    %465 = vmatprep.subr.mxu0 0.0
    %466 = vmatpush2.msra.mxu0 0.0
    %467 = vmatprep.subr.mxu0 0.0
    %468 = vmatpush2.msra.mxu0 0.0
    %469 = vmatprep.subr.mxu0 0.0
    %470 = vmatpush2.msra.mxu0 0.0
    %471 = vmatprep.subr.mxu0 0.0
    %472 = vmatpush2.msra.mxu0 0.0
    %473 = vmatprep.subr.mxu0 0.0
    %474 = vmatpush2.msra.mxu0 0.0
    %475 = vmatprep.subr.mxu0 0.0
    %476 = vmatpush2.msra.mxu0 0.0
    %477 = vmatprep.subr.mxu0 0.0
    %478 = vmatpush2.msra.mxu0 0.0
    %479 = vmatprep.subr.mxu0 0.0
    %480 = vmatpush2.msra.mxu0 0.0
    %481 = vmatprep.subr.mxu0 0.0
    %482 = vmatpush2.msra.mxu0 0.0
    %483 = vmatprep.subr.mxu0 0.0
    %484 = vmatpush2.msra.mxu0 0.0
    %485 = vmatprep.subr.mxu0 0.0
    %486 = vmatpush2.msra.mxu0 0.0
    %487 = vmatprep.subr.mxu0 0.0
    %488 = vmatpush2.msra.mxu0 0.0
    %489 = vmatprep.subr.mxu0 0.0
    %490 = vmatpush2.msra.mxu0 0.0
    %491 = vmatprep.subr.mxu0 0.0
    %492 = vmatpush2.msra.mxu0 0.0
    %493 = vmatprep.subr.mxu0 0.0
    %494 = vmatpush2.msra.mxu0 0.0
    %495 = vmatprep.mubr.f32.mxu0 0.0
    %v496 = vand.u32 %v45, 4294901760
    %v497 = vsub.f32 %v45, %v496
    %v498 = vand.u32 %v497, 4294901760
    %499 = vmatmul.mubr.f32.gmra.mxu0 %v498
    %v500 = vpop.f32.mrf.mxu0
    %v501 = vadd.f32 %v412, %v500
    %v502 = vpop.f32.mrf.mxu0
    %503 = vdwg.mxu0
    %504 = vmatprep.subr.mxu0 0.0
    %v505 = vand.u32 %v61, 4294901760
    %v506 = vsub.f32 %v61, %v505
    %v507 = vand.u32 %v506, 4294901760
    %508 = vmatpush1.msra.mxu0 %v507
    %509 = vmatprep.subr.mxu0 0.0
    %v510 = vand.u32 %v60, 4294901760
    %v511 = vsub.f32 %v60, %v510
    %v512 = vand.u32 %v511, 4294901760
    %513 = vmatpush1.msra.mxu0 %v512
    %514 = vmatprep.subr.mxu0 0.0
    %v515 = vand.u32 %v59, 4294901760
    %v516 = vsub.f32 %v59, %v515
    %v517 = vand.u32 %v516, 4294901760
    %518 = vmatpush1.msra.mxu0 %v517
    %519 = vmatprep.subr.mxu0 0.0
    %v520 = vand.u32 %v58, 4294901760
    %v521 = vsub.f32 %v58, %v520
    %v522 = vand.u32 %v521, 4294901760
    %523 = vmatpush1.msra.mxu0 %v522
    %524 = vmatprep.subr.mxu0 0.0
    %v525 = vand.u32 %v57, 4294901760
    %v526 = vsub.f32 %v57, %v525
    %v527 = vand.u32 %v526, 4294901760
    %528 = vmatpush1.msra.mxu0 %v527
    %529 = vmatprep.subr.mxu0 0.0
    %v530 = vand.u32 %v56, 4294901760
    %v531 = vsub.f32 %v56, %v530
    %v532 = vand.u32 %v531, 4294901760
    %533 = vmatpush1.msra.mxu0 %v532
    %534 = vmatprep.subr.mxu0 0.0
    %v535 = vand.u32 %v55, 4294901760
    %v536 = vsub.f32 %v55, %v535
    %v537 = vand.u32 %v536, 4294901760
    %538 = vmatpush1.msra.mxu0 %v537
    %539 = vmatprep.subr.mxu0 0.0
    %v540 = vand.u32 %v54, 4294901760
    %v541 = vsub.f32 %v54, %v540
    %v542 = vand.u32 %v541, 4294901760
    %543 = vmatpush1.msra.mxu0 %v542
    %544 = vmatprep.subr.mxu0 0.0
    %v545 = vand.u32 %v53, 4294901760
    %v546 = vsub.f32 %v53, %v545
    %v547 = vand.u32 %v546, 4294901760
    %548 = vmatpush1.msra.mxu0 %v547
    %549 = vmatprep.subr.mxu0 0.0
    %v550 = vand.u32 %v52, 4294901760
    %v551 = vsub.f32 %v52, %v550
    %v552 = vand.u32 %v551, 4294901760
    %553 = vmatpush1.msra.mxu0 %v552
    %554 = vmatprep.subr.mxu0 0.0
    %v555 = vand.u32 %v51, 4294901760
    %v556 = vsub.f32 %v51, %v555
    %v557 = vand.u32 %v556, 4294901760
    %558 = vmatpush1.msra.mxu0 %v557
    %559 = vmatprep.subr.mxu0 0.0
    %v560 = vand.u32 %v50, 4294901760
    %v561 = vsub.f32 %v50, %v560
    %v562 = vand.u32 %v561, 4294901760
    %563 = vmatpush1.msra.mxu0 %v562
    %564 = vmatprep.subr.mxu0 0.0
    %v565 = vand.u32 %v49, 4294901760
    %v566 = vsub.f32 %v49, %v565
    %v567 = vand.u32 %v566, 4294901760
    %568 = vmatpush1.msra.mxu0 %v567
    %569 = vmatprep.subr.mxu0 0.0
    %v570 = vand.u32 %v48, 4294901760
    %v571 = vsub.f32 %v48, %v570
    %v572 = vand.u32 %v571, 4294901760
    %573 = vmatpush1.msra.mxu0 %v572
    %574 = vmatprep.subr.mxu0 0.0
    %v575 = vand.u32 %v47, 4294901760
    %v576 = vsub.f32 %v47, %v575
    %v577 = vand.u32 %v576, 4294901760
    %578 = vmatpush1.msra.mxu0 %v577
    %579 = vmatprep.subr.mxu0 0.0
    %v580 = vand.u32 %v46, 4294901760
    %v581 = vsub.f32 %v46, %v580
    %v582 = vand.u32 %v581, 4294901760
    %583 = vmatpush1.msra.mxu0 %v582
    %584 = vmatprep.subr.mxu0 0.0
    %585 = vmatpush2.msra.mxu0 0.0
    %586 = vmatprep.subr.mxu0 0.0
    %587 = vmatpush2.msra.mxu0 0.0
    %588 = vmatprep.subr.mxu0 0.0
    %589 = vmatpush2.msra.mxu0 0.0
    %590 = vmatprep.subr.mxu0 0.0
    %591 = vmatpush2.msra.mxu0 0.0
    %592 = vmatprep.subr.mxu0 0.0
    %593 = vmatpush2.msra.mxu0 0.0
    %594 = vmatprep.subr.mxu0 0.0
    %595 = vmatpush2.msra.mxu0 0.0
    %596 = vmatprep.subr.mxu0 0.0
    %597 = vmatpush2.msra.mxu0 0.0
    %598 = vmatprep.subr.mxu0 0.0
    %599 = vmatpush2.msra.mxu0 0.0
    %600 = vmatprep.subr.mxu0 0.0
    %601 = vmatpush2.msra.mxu0 0.0
    %602 = vmatprep.subr.mxu0 0.0
    %603 = vmatpush2.msra.mxu0 0.0
    %604 = vmatprep.subr.mxu0 0.0
    %605 = vmatpush2.msra.mxu0 0.0
    %606 = vmatprep.subr.mxu0 0.0
    %607 = vmatpush2.msra.mxu0 0.0
    %608 = vmatprep.subr.mxu0 0.0
    %609 = vmatpush2.msra.mxu0 0.0
    %610 = vmatprep.subr.mxu0 0.0
    %611 = vmatpush2.msra.mxu0 0.0
    %612 = vmatprep.subr.mxu0 0.0
    %613 = vmatpush2.msra.mxu0 0.0
    %614 = vmatprep.subr.mxu0 0.0
    %615 = vmatpush2.msra.mxu0 0.0
    %616 = vmatprep.mubr.f32.mxu0 0.0
    %v617 = vand.u32 %v45, 4294901760
    %618 = vmatmul.mubr.f32.gmra.mxu0 %v617
    %v619 = vpop.f32.mrf.mxu0
    %v620 = vadd.f32 %v501, %v619
    %v621 = vpop.f32.mrf.mxu0
    %622 = vdwg.mxu0
    %623 = vmatprep.subr.mxu0 0.0
    %v624 = vand.u32 %v61, 4294901760
    %625 = vmatpush1.msra.mxu0 %v624
    %626 = vmatprep.subr.mxu0 0.0
    %v627 = vand.u32 %v60, 4294901760
    %628 = vmatpush1.msra.mxu0 %v627
    %629 = vmatprep.subr.mxu0 0.0
    %v630 = vand.u32 %v59, 4294901760
    %631 = vmatpush1.msra.mxu0 %v630
    %632 = vmatprep.subr.mxu0 0.0
    %v633 = vand.u32 %v58, 4294901760
    %634 = vmatpush1.msra.mxu0 %v633
    %635 = vmatprep.subr.mxu0 0.0
    %v636 = vand.u32 %v57, 4294901760
    %637 = vmatpush1.msra.mxu0 %v636
    %638 = vmatprep.subr.mxu0 0.0
    %v639 = vand.u32 %v56, 4294901760
    %640 = vmatpush1.msra.mxu0 %v639
    %641 = vmatprep.subr.mxu0 0.0
    %v642 = vand.u32 %v55, 4294901760
    %643 = vmatpush1.msra.mxu0 %v642
    %644 = vmatprep.subr.mxu0 0.0
    %v645 = vand.u32 %v54, 4294901760
    %646 = vmatpush1.msra.mxu0 %v645
    %647 = vmatprep.subr.mxu0 0.0
    %v648 = vand.u32 %v53, 4294901760
    %649 = vmatpush1.msra.mxu0 %v648
    %650 = vmatprep.subr.mxu0 0.0
    %v651 = vand.u32 %v52, 4294901760
    %652 = vmatpush1.msra.mxu0 %v651
    %653 = vmatprep.subr.mxu0 0.0
    %v654 = vand.u32 %v51, 4294901760
    %655 = vmatpush1.msra.mxu0 %v654
    %656 = vmatprep.subr.mxu0 0.0
    %v657 = vand.u32 %v50, 4294901760
    %658 = vmatpush1.msra.mxu0 %v657
    %659 = vmatprep.subr.mxu0 0.0
    %v660 = vand.u32 %v49, 4294901760
    %661 = vmatpush1.msra.mxu0 %v660
    %662 = vmatprep.subr.mxu0 0.0
    %v663 = vand.u32 %v48, 4294901760
    %664 = vmatpush1.msra.mxu0 %v663
    %665 = vmatprep.subr.mxu0 0.0
    %v666 = vand.u32 %v47, 4294901760
    %667 = vmatpush1.msra.mxu0 %v666
    %668 = vmatprep.subr.mxu0 0.0
    %v669 = vand.u32 %v46, 4294901760
    %670 = vmatpush1.msra.mxu0 %v669
    %671 = vmatprep.subr.mxu0 0.0
    %672 = vmatpush2.msra.mxu0 0.0
    %673 = vmatprep.subr.mxu0 0.0
    %674 = vmatpush2.msra.mxu0 0.0
    %675 = vmatprep.subr.mxu0 0.0
    %676 = vmatpush2.msra.mxu0 0.0
    %677 = vmatprep.subr.mxu0 0.0
    %678 = vmatpush2.msra.mxu0 0.0
    %679 = vmatprep.subr.mxu0 0.0
    %680 = vmatpush2.msra.mxu0 0.0
    %681 = vmatprep.subr.mxu0 0.0
    %682 = vmatpush2.msra.mxu0 0.0
    %683 = vmatprep.subr.mxu0 0.0
    %684 = vmatpush2.msra.mxu0 0.0
    %685 = vmatprep.subr.mxu0 0.0
    %686 = vmatpush2.msra.mxu0 0.0
    %687 = vmatprep.subr.mxu0 0.0
    %688 = vmatpush2.msra.mxu0 0.0
    %689 = vmatprep.subr.mxu0 0.0
    %690 = vmatpush2.msra.mxu0 0.0
    %691 = vmatprep.subr.mxu0 0.0
    %692 = vmatpush2.msra.mxu0 0.0
    %693 = vmatprep.subr.mxu0 0.0
    %694 = vmatpush2.msra.mxu0 0.0
    %695 = vmatprep.subr.mxu0 0.0
    %696 = vmatpush2.msra.mxu0 0.0
    %697 = vmatprep.subr.mxu0 0.0
    %698 = vmatpush2.msra.mxu0 0.0
    %699 = vmatprep.subr.mxu0 0.0
    %700 = vmatpush2.msra.mxu0 0.0
    %701 = vmatprep.subr.mxu0 0.0
    %702 = vmatpush2.msra.mxu0 0.0
    %703 = vmatprep.mubr.f32.mxu0 0.0
    %v704 = vand.u32 %v45, 4294901760
    %705 = vmatmul.mubr.f32.gmra.mxu0 %v704
    %v706 = vpop.f32.mrf.mxu0
    %v707 = vadd.f32 %v620, %v706
    %v708 = vpop.f32.mrf.mxu0
    %709 = vdwg.mxu0
    %vm710 = vcmask 261120
    %711 = vst.msk [vmem:[#allocation2] sm:$0xff] %vm710, %v707
    // Predicated region
    $region14: #{tpu_custom_call.1} parent=1 // pred_check
      _
    $region15: #{tpu_custom_call.1} parent=1 // pred_check_branch
      %713 = sbr.rel (0) target = $region17
    $region16: #{tpu_custom_call.1} parent=1 // pred_region
      %s715 = ssub.s32 128, 128
      %716 = vsyncadd [#allocation3], %s715
      %s718 = sshll.u32 [#allocation2], 4
      %s719 = int_to_ptr.vmem [resolvable:$true] %s718
      %721 = dma.vmem_to_hbm [thread:$0]  %s719, 128, %s3, [#allocation3]
    $region17: #{tpu_custom_call.1} parent=1 // pred_fallthru
      _
    // Predicated region
    $region18: #{tpu_custom_call.1} parent=1 // pred_check
      _
    $region19: #{tpu_custom_call.1} parent=1 // pred_check_branch
      %723 = sbr.rel (0) target = $region21
    $region20: #{tpu_custom_call.1} parent=1 // pred_region
      %724 = dma.done [#allocation3], 128
    $region21: #{tpu_custom_call.1} parent=1 // pred_fallthru
      _
    %725 = vsyncpa [#allocation3], 1

</llo_original>
